<compile_context>
chip_gen: v5e
topology: v5e:2x2
jax: 0.10.0
libtpu: 0.0.40
codegen_flags: <defaults>
</compile_context>

<pallas_src>
import math

import jax
import jax.numpy as jnp
from jax.experimental import pallas as pl
from jax.experimental.pallas import tpu as pltpu


def _flatten_copy_kernel(x_ref, o_ref):
    # (bn, L) tile in VMEM -> identical (bn, L) tile (output aliases input).
    o_ref[...] = x_ref[...]


# Lane widths to try for the repacked 2-D view (all multiples of 128).
_LANE_CANDIDATES = (4096, 2048, 1024, 512, 256, 128)
# ~2 MiB tiles: input+output, double-buffered => ~8 MiB VMEM, safe on every gen.
_TARGET_TILE_BYTES = 2 * 1024 * 1024


def _pick_repack(total: int):
    """Pick (rows, L) with rows*L == total, L % 128 == 0, preferring rows % 8 == 0."""
    best = None
    for lane in _LANE_CANDIDATES:
        if total % lane != 0:
            continue
        rows = total // lane
        rows_ok = (rows % 8 == 0) or (rows < 8)
        key = (rows_ok, lane)
        if best is None or key > best[0]:
            best = (key, rows, lane)
    if best is None:
        return None
    return best[1], best[2]


def flatten(x: jax.Array) -> jax.Array:
    """Equivalent of torch `input_tensor.view(input_tensor.size(0), -1)`."""
    n = x.shape[0]
    d = math.prod(x.shape[1:]) if len(x.shape) > 1 else 1
    total = n * d
    itemsize = jnp.dtype(x.dtype).itemsize

    repack = _pick_repack(total)
    if repack is None:
        # Total element count not a multiple of 128: a lane-dense repack is not
        # possible without padding.  Flatten is metadata-only, so the reshape
        # alone is already the exact (and fastest) answer.
        # TODO(synk): pad-to-128 + slice path if a Pallas copy is mandatory here.
        return jnp.reshape(x, (n, d))

    rows, lane = repack
    # Metadata-only repack; row-major element order is preserved, so this is
    # exactly the contiguous-NCHW .view() ordering.
    x2d = jnp.reshape(x, (rows, lane))

    # Row-tile size: multiple of 8, ~2 MiB per tile, capped at the full array.
    if rows >= 8:
        bn_cap = max(8, (_TARGET_TILE_BYTES // (lane * itemsize)) // 8 * 8)
        bn = min(rows, bn_cap)
    else:
        bn = rows  # full array dim (allowed even when < 8)

    grid = (pl.cdiv(rows, bn),)

    out = pl.pallas_call(
        _flatten_copy_kernel,
        out_shape=jax.ShapeDtypeStruct((rows, lane), x.dtype),
        grid=grid,
        in_specs=[pl.BlockSpec((bn, lane), lambda i: (i, 0))],
        out_specs=pl.BlockSpec((bn, lane), lambda i: (i, 0)),
        # Output reuses the input HBM buffer: no extra allocation / writeback
        # of a second array for what is semantically a no-op.
        input_output_aliases={0: 0},
        cost_estimate=pl.CostEstimate(
            flops=0,
            transcendentals=0,
            bytes_accessed=2 * total * itemsize,
        ),
        compiler_params=pltpu.CompilerParams(
            dimension_semantics=("parallel",),
        ),
    )(x2d)

    # Metadata-only reshape back to the (N, C*H*W) view.
    return jnp.reshape(out, (n, d))


if __name__ == "__main__":
    key = jax.random.PRNGKey(0)
    # Small NCHW input consistent with a conv-style feature map.
    x = jax.random.normal(key, (2, 4, 16, 16), dtype=jnp.float32)

    # Reference (== torch .view(N, -1) on a contiguous NCHW tensor).
    y_ref = jnp.reshape(x, (x.shape[0], -1))
    y_ref = jax.block_until_ready(y_ref)

    y = jax.jit(flatten)(x)
    y = jax.block_until_ready(y)

    assert y.shape == (2, 4 * 16 * 16), y.shape
    assert y.dtype == x.dtype
    assert bool(jnp.array_equal(y, y_ref))

    print("KERNEL_OK")
</pallas_src>

<mosaic_0001>
module attributes {stable_mosaic.version = 11 : i64} {
  func.func @_flatten_copy_kernel(%arg0: i32, %arg1: memref<1x2048xf32, #tpu.memory_space<vmem>>, %arg2: memref<1x2048xf32, #tpu.memory_space<vmem>>) attributes {dimension_semantics = [#tpu.dimension_semantics<parallel>], iteration_bounds = array<i64: 1>, scalar_prefetch = 0 : i64, scratch_operands = 0 : i64, tpu.core_type = #tpu.core_type<tc>, window_params = [{transform_indices = @transform_0, window_bounds = array<i64: 1, 2048>}, {transform_indices = @transform_1, window_bounds = array<i64: 1, 2048>}]} {
    %c0 = arith.constant 0 : index
    %c0_0 = arith.constant 0 : index
    %0 = vector.load %arg1[%c0, %c0_0] : memref<1x2048xf32, #tpu.memory_space<vmem>>, vector<1x2048xf32>
    %c0_1 = arith.constant 0 : index
    %c0_2 = arith.constant 0 : index
    %1 = vector.load %arg2[%c0_1, %c0_2] : memref<1x2048xf32, #tpu.memory_space<vmem>>, vector<1x2048xf32>
    tpu.vector_store %arg2[%c0_1, %c0_2], %0 {strides = array<i32>} : memref<1x2048xf32, #tpu.memory_space<vmem>>, vector<1x2048xf32>,
    return
  }
  func.func @transform_0(%arg0: i32) -> (i32, i32) {
    %c0_i32 = arith.constant 0 : i32
    %c0_i32_0 = arith.constant 0 : i32
    return %arg0, %c0_i32 : i32, i32
  }
  func.func @transform_1(%arg0: i32) -> (i32, i32) {
    %c0_i32 = arith.constant 0 : i32
    %c0_i32_0 = arith.constant 0 : i32
    return %arg0, %c0_i32 : i32, i32
  }
}

</mosaic_0001>

<llo_original>
// kernel: flatten.1
$region0: #{flatten.1}
  #allocation0 [shape = 'u32[]', space=smem, size = 0x4, offset = 0x4, fixed_abs, tag = 'smem constant byte address 0x4 - core index']
  #allocation1 [shape = 'u32[72,128]{1,0:T(1,128)}', space=vmem, size = 0x9000, scoped, tag = 'internal scratch']
  %s0 = inlined_call_operand.vmem [shape: f32[1,2048], index: 0, kind: input, shape index: {}, may-alias: {0,1}]
  %s1 = inlined_call_operand.vmem [shape: f32[1,2048], index: 1, kind: output, shape index: {}, may-alias: {0,1}]
  %s2 = sld [smem:[#allocation0]]
  $region14: #{flatten.1} parent=0
    _
  %s4 = ssub.s32 1, %s2
  %s5 = scalar_select 0, %s4, %s2
  // Predicated region
  $region2: #{flatten.1} parent=0 // pred_check
    _
  $region3: #{flatten.1} parent=0 // pred_check_branch
    %7 = sbr.rel (0) target = $region5
  $region4: #{flatten.1} parent=0 // pred_region
    _
  $region5: #{flatten.1} parent=0 // pred_fallthru
    _
  %v8 = vld [vmem:[%s0] sm:$0xff]
  %v9 = vld [vmem:[%s0 + $0x8] sm:$0xff]
  %10 = vst [vmem:[%s1] sm:$0xff] %v8
  %11 = vst [vmem:[%s1 + $0x8] sm:$0xff] %v9
  // Predicated region
  $region6: #{flatten.1} parent=0 // pred_check
    _
  $region7: #{flatten.1} parent=0 // pred_check_branch
    %13 = sbr.rel (0) target = $region9
  $region8: #{flatten.1} parent=0 // pred_region
    _
  $region9: #{flatten.1} parent=0 // pred_fallthru
    _
  // Predicated region
  $region10: #{flatten.1} parent=0 // pred_check
    _
  $region11: #{flatten.1} parent=0 // pred_check_branch
    %15 = sbr.rel (0) target = $region13
  $region12: #{flatten.1} parent=0 // pred_region
    _
  $region13: #{flatten.1} parent=0 // pred_fallthru
    _

</llo_original>
